<compile_context>
chip_gen: v7x
topology: tpu7x:2x2x1
jax: 0.10.0
libtpu: 0.0.40
codegen_flags: <defaults>
</compile_context>

<pallas_src>
import functools

import jax
import jax.numpy as jnp
from jax import lax
from jax.experimental import pallas as pl
from jax.experimental.pallas import tpu as pltpu


def _round_up(x: int, m: int) -> int:
    return (x + m - 1) // m * m


def _pad2(a, s0, s1):
    p0, p1 = s0 - a.shape[0], s1 - a.shape[1]
    if p0 == 0 and p1 == 0:
        return a
    return jnp.pad(a, ((0, p0), (0, p1)))


def lora_linear_kernel(x_ref, w_ref, bias_ref, b_ref, a_ref, o_ref,
                       acc_ref, z_ref):
    """One (i, j, k) grid step.

    x_ref    : (tm, tk)   activation tile
    w_ref    : (tn, tk)   W_base tile, native (out, in) layout
    bias_ref : (1, tn)
    b_ref    : (r_p, tk)  LoRA B tile, native (r, in) layout
    a_ref    : (tn, r_p)  LoRA A tile, native (out, r) layout
    o_ref    : (tm, tn)
    acc_ref  : (tm, tn)   f32 VMEM accumulator (persistent across k)
    z_ref    : (tm, r_p)  f32 VMEM LoRA intermediate (persistent across j, k)
    """
    j = pl.program_id(1)
    k = pl.program_id(2)
    nk = pl.num_programs(2)

    @pl.when(k == 0)
    def _():
        acc_ref[...] = jnp.zeros_like(acc_ref)

    x = x_ref[...]

    # Base path: x_tile @ W_tile.T (contract feature axis of both) on the MXU.
    acc_ref[...] += lax.dot_general(
        x, w_ref[...], (((1,), (1,)), ((), ())),
        preferred_element_type=jnp.float32)

    # LoRA down-projection: accumulate z = x @ B.T once per M-tile (j == 0);
    # reused for all output-column tiles j of the same i.
    @pl.when(j == 0)
    def _():
        @pl.when(k == 0)
        def _():
            z_ref[...] = jnp.zeros_like(z_ref)

        z_ref[...] += lax.dot_general(
            x, b_ref[...], (((1,), (1,)), ((), ())),
            preferred_element_type=jnp.float32)

    # Finalize once per output tile: bias + LoRA up-projection + writeback.
    @pl.when(k == nk - 1)
    def _():
        lora = lax.dot_general(
            z_ref[...].astype(a_ref.dtype), a_ref[...],
            (((1,), (1,)), ((), ())),
            preferred_element_type=jnp.float32)
        o_ref[...] = (acc_ref[...] + bias_ref[...] + lora).astype(o_ref.dtype)


@functools.partial(jax.jit, static_argnames=("tm", "tn", "tk"))
def lora_linear(x, w_base, bias, B_w, A_w, *, tm=None, tn=None, tk=None):
    """y = x @ W_base.T + bias + (x @ B.T) @ A.T, for x of shape (..., in_dim)."""
    out_dim, in_dim = w_base.shape
    r = B_w.shape[0]

    lead_shape = x.shape[:-1]
    x2 = x.reshape(-1, in_dim)
    M = x2.shape[0]

    # Tile sizes: lane-dense (multiples of (8, 128)), capped so a double-
    # buffered step stays a few MiB of VMEM (safe on v5e/v6e/v7x defaults).
    if tm is None:
        tm = min(256, _round_up(M, 8))
    if tn is None:
        tn = min(512, _round_up(out_dim, 128))
    if tk is None:
        tk = min(512, _round_up(in_dim, 128))

    M_p = _round_up(M, tm)
    N_p = _round_up(out_dim, tn)
    K_p = _round_up(in_dim, tk)
    r_p = _round_up(r, 128)  # lane-dense LoRA rank (LoRA flops stay negligible)

    dt = x2.dtype
    x_p = _pad2(x2, M_p, K_p)
    w_p = _pad2(w_base, N_p, K_p)                       # native (out, in)
    b2_p = _pad2(bias.reshape(1, out_dim), 1, N_p)      # (1, out)
    B_p = _pad2(B_w, r_p, K_p)                          # native (r, in)
    A_p = _pad2(A_w, N_p, r_p)                          # native (out, r)

    grid = (M_p // tm, N_p // tn, K_p // tk)

    dsize = jnp.dtype(dt).itemsize
    cost = pl.CostEstimate(
        flops=2 * M_p * K_p * N_p + 2 * M_p * K_p * r_p + 2 * M_p * r_p * N_p,
        transcendentals=0,
        bytes_accessed=dsize * (M_p * K_p + N_p * K_p + M_p * N_p
                                + r_p * K_p + N_p * r_p + N_p),
    )

    out = pl.pallas_call(
        lora_linear_kernel,
        out_shape=jax.ShapeDtypeStruct((M_p, N_p), dt),
        grid_spec=pltpu.PrefetchScalarGridSpec(
            num_scalar_prefetch=0,
            grid=grid,
            in_specs=[
                pl.BlockSpec((tm, tk), lambda i, j, k: (i, k)),    # x
                pl.BlockSpec((tn, tk), lambda i, j, k: (j, k)),    # W_base
                pl.BlockSpec((1, tn), lambda i, j, k: (0, j)),     # bias
                pl.BlockSpec((r_p, tk), lambda i, j, k: (0, k)),   # B
                pl.BlockSpec((tn, r_p), lambda i, j, k: (j, 0)),   # A
            ],
            out_specs=pl.BlockSpec((tm, tn), lambda i, j, k: (i, j)),
            scratch_shapes=[
                pltpu.VMEM((tm, tn), jnp.float32),   # base accumulator
                pltpu.VMEM((tm, r_p), jnp.float32),  # LoRA z = x @ B.T
            ],
        ),
        compiler_params=pltpu.CompilerParams(
            # i: independent M-tiles -> megacore-shardable on v7x.
            # j: must stay "arbitrary" (j>0 reuses z computed at j==0).
            # k: reduction axis, innermost.
            dimension_semantics=("parallel", "arbitrary", "arbitrary"),
        ),
        cost_estimate=cost,
    )(x_p, w_p, b2_p, B_p, A_p)

    y = out[:M, :out_dim]
    return y.reshape(*lead_shape, out_dim)


def _reference(x, w_base, bias, B_w, A_w):
    in_dim = w_base.shape[1]
    x2 = x.reshape(-1, in_dim)
    y = x2 @ w_base.T + bias + (x2 @ B_w.T) @ A_w.T
    return y.reshape(*x.shape[:-1], w_base.shape[0])


if __name__ == "__main__":
    key = jax.random.PRNGKey(0)
    k_x, k_w, k_b, k_a, k_lb, k_x2, k_w2, k_b2, k_a2, k_lb2 = jax.random.split(key, 10)

    # ---- Test 1: small shapes matching the module (batch=2, seq=8, hidden=32) ----
    batch, seq, in_dim, out_dim, r = 2, 8, 32, 16, 4

    x = jax.random.normal(k_x, (batch, seq, in_dim), dtype=jnp.float32)
    w_base = jax.random.normal(k_w, (out_dim, in_dim), dtype=jnp.float32) * 0.1
    bias = jax.random.normal(k_b, (out_dim,), dtype=jnp.float32) * 0.1
    # Module init: B is zero-initialized, A normal-initialized.
    B_w = jnp.zeros((r, in_dim), dtype=jnp.float32)
    A_w = jax.random.normal(k_a, (out_dim, r), dtype=jnp.float32)

    y = jax.block_until_ready(lora_linear(x, w_base, bias, B_w, A_w))
    y_ref = _reference(x, w_base, bias, B_w, A_w)
    assert jnp.allclose(y, y_ref, atol=1e-5, rtol=1e-5), "mismatch (zero-init B)"

    # Same shapes but non-zero B (post-training state) to exercise the LoRA path.
    B_nz = jax.random.normal(k_lb, (r, in_dim), dtype=jnp.float32) * 0.05
    y = jax.block_until_ready(lora_linear(x, w_base, bias, B_nz, A_w))
    y_ref = _reference(x, w_base, bias, B_nz, A_w)
    assert jnp.allclose(y, y_ref, atol=1e-5, rtol=1e-5), "mismatch (nonzero B)"

    # ---- Test 2: force a multi-tile grid (2,2,2) to exercise the k-reduction
    #      accumulator and the z-reuse across output-column tiles ----
    M2, in2, out2, r2 = 64, 256, 256, 8
    x_b = jax.random.normal(k_x2, (M2, in2), dtype=jnp.float32)
    w_b = jax.random.normal(k_w2, (out2, in2), dtype=jnp.float32) * 0.05
    bias_b = jax.random.normal(k_b2, (out2,), dtype=jnp.float32) * 0.1
    B_b = jax.random.normal(k_lb2, (r2, in2), dtype=jnp.float32) * 0.05
    A_b = jax.random.normal(k_a2, (out2, r2), dtype=jnp.float32)

    y_b = jax.block_until_ready(
        lora_linear(x_b, w_b, bias_b, B_b, A_b, tm=32, tn=128, tk=128))
    y_b_ref = _reference(x_b, w_b, bias_b, B_b, A_b)
    assert jnp.allclose(y_b, y_b_ref, atol=1e-4, rtol=1e-4), "mismatch (tiled grid)"

    print("KERNEL_OK")
</pallas_src>

<mosaic_0001>
module attributes {stable_mosaic.version = 11 : i64} {
  func.func @lora_linear_kernel(%arg0: i32, %arg1: i32, %arg2: i32, %arg3: memref<16x128xf32, #tpu.memory_space<vmem>>, %arg4: memref<128x128xf32, #tpu.memory_space<vmem>>, %arg5: memref<1x128xf32, #tpu.memory_space<vmem>>, %arg6: memref<128x128xf32, #tpu.memory_space<vmem>>, %arg7: memref<128x128xf32, #tpu.memory_space<vmem>>, %arg8: memref<16x128xf32, #tpu.memory_space<vmem>>, %arg9: memref<16x128xf32, #tpu.memory_space<vmem>>, %arg10: memref<16x128xf32, #tpu.memory_space<vmem>>) attributes {dimension_semantics = [#tpu.dimension_semantics<parallel>, #tpu.dimension_semantics<arbitrary>, #tpu.dimension_semantics<arbitrary>], iteration_bounds = array<i64: 1, 1, 1>, scalar_prefetch = 0 : i64, scratch_operands = 2 : i64, tpu.core_type = #tpu.core_type<tc>, window_params = [{transform_indices = @transform_0, window_bounds = array<i64: 16, 128>}, {transform_indices = @transform_1, window_bounds = array<i64: 128, 128>}, {transform_indices = @transform_2, window_bounds = array<i64: 1, 128>}, {transform_indices = @transform_3, window_bounds = array<i64: 128, 128>}, {transform_indices = @transform_4, window_bounds = array<i64: 128, 128>}, {transform_indices = @transform_5, window_bounds = array<i64: 16, 128>}]} {
    %c0_i32 = arith.constant 0 : i32
    %0 = arith.cmpi eq, %arg2, %c0_i32 : i32
    %1 = arith.extui %0 : i1 to i32
    %c0_i32_0 = arith.constant 0 : i32
    %2 = arith.cmpi ne, %1, %c0_i32_0 : i32
    scf.if %2 {
      %cst_12 = arith.constant 0.000000e+00 : f32
      %15 = vector.broadcast %cst_12 : f32 to vector<16x128xf32>
      %c0_13 = arith.constant 0 : index
      %c0_14 = arith.constant 0 : index
      %16 = vector.load %arg9[%c0_13, %c0_14] : memref<16x128xf32, #tpu.memory_space<vmem>>, vector<16x128xf32>
      tpu.vector_store %arg9[%c0_13, %c0_14], %15 {strides = array<i32>} : memref<16x128xf32, #tpu.memory_space<vmem>>, vector<16x128xf32>,
    } else {
    }
    %c0 = arith.constant 0 : index
    %c0_1 = arith.constant 0 : index
    %3 = vector.load %arg3[%c0, %c0_1] : memref<16x128xf32, #tpu.memory_space<vmem>>, vector<16x128xf32>
    %c0_2 = arith.constant 0 : index
    %c0_3 = arith.constant 0 : index
    %4 = vector.load %arg9[%c0_2, %c0_3] : memref<16x128xf32, #tpu.memory_space<vmem>>, vector<16x128xf32>
    %c0_4 = arith.constant 0 : index
    %c0_5 = arith.constant 0 : index
    %5 = vector.load %arg4[%c0_4, %c0_5] : memref<128x128xf32, #tpu.memory_space<vmem>>, vector<128x128xf32>
    %cst = arith.constant dense<0.000000e+00> : vector<16x128xf32>
    %6 = tpu.matmul %3, %5, %cst {dimension_numbers = #tpu.dot_dimension_numbers<[1], [1], [0], [0], [0, 0, 1, 0], [], []>} : vector<16x128xf32>, vector<128x128xf32>, vector<16x128xf32> -> vector<16x128xf32>
    %7 = arith.addf %4, %6 : vector<16x128xf32>
    %c0_6 = arith.constant 0 : index
    %c0_7 = arith.constant 0 : index
    %8 = vector.load %arg9[%c0_6, %c0_7] : memref<16x128xf32, #tpu.memory_space<vmem>>, vector<16x128xf32>
    tpu.vector_store %arg9[%c0_6, %c0_7], %7 {strides = array<i32>} : memref<16x128xf32, #tpu.memory_space<vmem>>, vector<16x128xf32>,
    %c0_i32_8 = arith.constant 0 : i32
    %9 = arith.cmpi eq, %arg1, %c0_i32_8 : i32
    %10 = arith.extui %9 : i1 to i32
    %c0_i32_9 = arith.constant 0 : i32
    %11 = arith.cmpi ne, %10, %c0_i32_9 : i32
    scf.if %11 {
      %c0_i32_12 = arith.constant 0 : i32
      %15 = arith.cmpi eq, %arg2, %c0_i32_12 : i32
      %16 = arith.extui %15 : i1 to i32
      %c0_i32_13 = arith.constant 0 : i32
      %17 = arith.cmpi ne, %16, %c0_i32_13 : i32
      scf.if %17 {
        %cst_21 = arith.constant 0.000000e+00 : f32
        %23 = vector.broadcast %cst_21 : f32 to vector<16x128xf32>
        %c0_22 = arith.constant 0 : index
        %c0_23 = arith.constant 0 : index
        %24 = vector.load %arg10[%c0_22, %c0_23] : memref<16x128xf32, #tpu.memory_space<vmem>>, vector<16x128xf32>
        tpu.vector_store %arg10[%c0_22, %c0_23], %23 {strides = array<i32>} : memref<16x128xf32, #tpu.memory_space<vmem>>, vector<16x128xf32>,
      } else {
      }
      %c0_14 = arith.constant 0 : index
      %c0_15 = arith.constant 0 : index
      %18 = vector.load %arg10[%c0_14, %c0_15] : memref<16x128xf32, #tpu.memory_space<vmem>>, vector<16x128xf32>
      %c0_16 = arith.constant 0 : index
      %c0_17 = arith.constant 0 : index
      %19 = vector.load %arg6[%c0_16, %c0_17] : memref<128x128xf32, #tpu.memory_space<vmem>>, vector<128x128xf32>
      %cst_18 = arith.constant dense<0.000000e+00> : vector<16x128xf32>
      %20 = tpu.matmul %3, %19, %cst_18 {dimension_numbers = #tpu.dot_dimension_numbers<[1], [1], [0], [0], [0, 0, 1, 0], [], []>} : vector<16x128xf32>, vector<128x128xf32>, vector<16x128xf32> -> vector<16x128xf32>
      %21 = arith.addf %18, %20 : vector<16x128xf32>
      %c0_19 = arith.constant 0 : index
      %c0_20 = arith.constant 0 : index
      %22 = vector.load %arg10[%c0_19, %c0_20] : memref<16x128xf32, #tpu.memory_space<vmem>>, vector<16x128xf32>
      tpu.vector_store %arg10[%c0_19, %c0_20], %21 {strides = array<i32>} : memref<16x128xf32, #tpu.memory_space<vmem>>, vector<16x128xf32>,
    } else {
    }
    %c0_i32_10 = arith.constant 0 : i32
    %12 = arith.cmpi eq, %arg2, %c0_i32_10 : i32
    %13 = arith.extui %12 : i1 to i32
    %c0_i32_11 = arith.constant 0 : i32
    %14 = arith.cmpi ne, %13, %c0_i32_11 : i32
    scf.if %14 {
      %c0_12 = arith.constant 0 : index
      %c0_13 = arith.constant 0 : index
      %15 = vector.load %arg10[%c0_12, %c0_13] : memref<16x128xf32, #tpu.memory_space<vmem>>, vector<16x128xf32>
      %c0_14 = arith.constant 0 : index
      %c0_15 = arith.constant 0 : index
      %16 = vector.load %arg7[%c0_14, %c0_15] : memref<128x128xf32, #tpu.memory_space<vmem>>, vector<128x128xf32>
      %cst_16 = arith.constant dense<0.000000e+00> : vector<16x128xf32>
      %17 = tpu.matmul %15, %16, %cst_16 {dimension_numbers = #tpu.dot_dimension_numbers<[1], [1], [0], [0], [0, 0, 1, 0], [], []>} : vector<16x128xf32>, vector<128x128xf32>, vector<16x128xf32> -> vector<16x128xf32>
      %c0_17 = arith.constant 0 : index
      %c0_18 = arith.constant 0 : index
      %18 = vector.load %arg9[%c0_17, %c0_18] : memref<16x128xf32, #tpu.memory_space<vmem>>, vector<16x128xf32>
      %c0_19 = arith.constant 0 : index
      %c0_20 = arith.constant 0 : index
      %19 = vector.load %arg5[%c0_19, %c0_20] : memref<1x128xf32, #tpu.memory_space<vmem>>, vector<1x128xf32>
      %20 = vector.broadcast %19 : vector<1x128xf32> to vector<16x128xf32>
      %21 = arith.addf %18, %20 : vector<16x128xf32>
      %22 = arith.addf %21, %17 : vector<16x128xf32>
      %c0_21 = arith.constant 0 : index
      %c0_22 = arith.constant 0 : index
      %23 = vector.load %arg8[%c0_21, %c0_22] : memref<16x128xf32, #tpu.memory_space<vmem>>, vector<16x128xf32>
      tpu.vector_store %arg8[%c0_21, %c0_22], %22 {strides = array<i32>} : memref<16x128xf32, #tpu.memory_space<vmem>>, vector<16x128xf32>,
    } else {
    }
    return
  }
  func.func @transform_0(%arg0: i32, %arg1: i32, %arg2: i32) -> (i32, i32) {
    %c0_i32 = arith.constant 0 : i32
    return %arg0, %arg2 : i32, i32
  }
  func.func @transform_1(%arg0: i32, %arg1: i32, %arg2: i32) -> (i32, i32) {
    %c0_i32 = arith.constant 0 : i32
    return %arg1, %arg2 : i32, i32
  }
  func.func @transform_2(%arg0: i32, %arg1: i32, %arg2: i32) -> (i32, i32) {
    %c0_i32 = arith.constant 0 : i32
    %c0_i32_0 = arith.constant 0 : i32
    return %c0_i32, %arg1 : i32, i32
  }
  func.func @transform_3(%arg0: i32, %arg1: i32, %arg2: i32) -> (i32, i32) {
    %c0_i32 = arith.constant 0 : i32
    %c0_i32_0 = arith.constant 0 : i32
    return %c0_i32, %arg2 : i32, i32
  }
  func.func @transform_4(%arg0: i32, %arg1: i32, %arg2: i32) -> (i32, i32) {
    %c0_i32 = arith.constant 0 : i32
    %c0_i32_0 = arith.constant 0 : i32
    return %arg1, %c0_i32 : i32, i32
  }
  func.func @transform_5(%arg0: i32, %arg1: i32, %arg2: i32) -> (i32, i32) {
    %c0_i32 = arith.constant 0 : i32
    return %arg0, %arg1 : i32, i32
  }
}

</mosaic_0001>

<llo_original>
// kernel: lora_linear.1
$region0: #{lora_linear.1}
  #allocation0 [shape = 'u32[]', space=smem, size = 0x4, offset = 0x4, fixed_abs, tag = 'smem constant byte address 0x4 - core index']
  #allocation1 [shape = 'u32[144,128]{1,0:T(1,128)}', space=vmem, size = 0x12000, scoped, tag = 'internal scratch']
  #allocation2 [shape = 'f32[16,128]{1,0:T(8,128)}', space=vmem, size = 0x2000, scoped, tag = 'scratch operand']
  #allocation3 [shape = 'f32[16,128]{1,0:T(8,128)}', space=vmem, size = 0x2000, scoped, tag = 'scratch operand']
  %s0 = inlined_call_operand.vmem [shape: f32[16,128], index: 0, kind: input, shape index: {}]
  %s1 = inlined_call_operand.vmem [shape: f32[128,128], index: 1, kind: input, shape index: {}]
  %s2 = inlined_call_operand.vmem [shape: f32[1,128], index: 2, kind: input, shape index: {}]
  %s3 = inlined_call_operand.vmem [shape: f32[128,128], index: 3, kind: input, shape index: {}]
  %s4 = inlined_call_operand.vmem [shape: f32[128,128], index: 4, kind: input, shape index: {}]
  %s5 = inlined_call_operand.vmem [shape: f32[16,128], index: 5, kind: output, shape index: {}]
  %s6 = sld [smem:[#allocation0]]
  $region46: #{lora_linear.1} parent=0
    _
  %s8 = ssub.s32 1, %s6
  %s9 = scalar_select 0, %s8, %s6
  // Predicated region
  $region2: #{lora_linear.1} parent=0 // pred_check
    _
  $region3: #{lora_linear.1} parent=0 // pred_check_branch
    %11 = sbr.rel (0) target = $region5
  $region4: #{lora_linear.1} parent=0 // pred_region
    _
  $region5: #{lora_linear.1} parent=0 // pred_fallthru
    _
  // Predicated region
  $region6: #{lora_linear.1} parent=0 // pred_check
    _
  $region7: #{lora_linear.1} parent=0 // pred_check_branch
    %13 = sbr.rel (0) target = $region9
  $region8: #{lora_linear.1} parent=0 // pred_region
    _
  $region9: #{lora_linear.1} parent=0 // pred_fallthru
    _
  // Predicated region
  $region10: #{lora_linear.1} parent=0 // pred_check
    _
  $region11: #{lora_linear.1} parent=0 // pred_check_branch
    %15 = sbr.rel (0) target = $region13
  $region12: #{lora_linear.1} parent=0 // pred_region
    _
  $region13: #{lora_linear.1} parent=0 // pred_fallthru
    _
  // Predicated region
  $region14: #{lora_linear.1} parent=0 // pred_check
    _
  $region15: #{lora_linear.1} parent=0 // pred_check_branch
    %17 = sbr.rel (0) target = $region17
  $region16: #{lora_linear.1} parent=0 // pred_region
    _
  $region17: #{lora_linear.1} parent=0 // pred_fallthru
    _
  // Predicated region
  $region18: #{lora_linear.1} parent=0 // pred_check
    _
  $region19: #{lora_linear.1} parent=0 // pred_check_branch
    %19 = sbr.rel (0) target = $region21
  $region20: #{lora_linear.1} parent=0 // pred_region
    _
  $region21: #{lora_linear.1} parent=0 // pred_fallthru
    _
  %p20 = scmp.eq.s32.totalorder 0, 0
  // Predicated region
  $region22: #{lora_linear.1} parent=0 // pred_check
    %p21 = pneg %p20
  $region23: #{lora_linear.1} parent=0 // pred_check_branch
    %23 = sbr.rel (%p21) target = $region25
  $region24: #{lora_linear.1} parent=0 // pred_region
    %24 = vst [vmem:[#allocation2] sm:$0xff] 0.0
    %25 = vst [vmem:[#allocation2 + $0x8] sm:$0xff] 0.0
  $region25: #{lora_linear.1} parent=0 // pred_fallthru
    _
  %v26 = vld [vmem:[%s0] sm:$0xff]
  %v27 = vld [vmem:[%s0 + $0x8] sm:$0xff]
  %v28 = vld [vmem:[#allocation2] sm:$0xff]
  %v29 = vld [vmem:[#allocation2 + $0x8] sm:$0xff]
  %v30 = vld [vmem:[%s1] sm:$0xff]
  %v31 = vld [vmem:[%s1 + $0x8] sm:$0xff]
  %v32 = vld [vmem:[%s1 + $0x10] sm:$0xff]
  %v33 = vld [vmem:[%s1 + $0x18] sm:$0xff]
  %v34 = vld [vmem:[%s1 + $0x20] sm:$0xff]
  %v35 = vld [vmem:[%s1 + $0x28] sm:$0xff]
  %v36 = vld [vmem:[%s1 + $0x30] sm:$0xff]
  %v37 = vld [vmem:[%s1 + $0x38] sm:$0xff]
  %v38 = vld [vmem:[%s1 + $0x40] sm:$0xff]
  %v39 = vld [vmem:[%s1 + $0x48] sm:$0xff]
  %v40 = vld [vmem:[%s1 + $0x50] sm:$0xff]
  %v41 = vld [vmem:[%s1 + $0x58] sm:$0xff]
  %v42 = vld [vmem:[%s1 + $0x60] sm:$0xff]
  %v43 = vld [vmem:[%s1 + $0x68] sm:$0xff]
  %v44 = vld [vmem:[%s1 + $0x70] sm:$0xff]
  %v45 = vld [vmem:[%s1 + $0x78] sm:$0xff]
  %46 = vmatprep.subr.mxu0 0.0
  %47 = vmatpush1.xpose.msra.mxu0 %v30
  %48 = vmatprep.subr.mxu0 0.0
  %49 = vmatpush1.xpose.msra.mxu0 %v31
  %50 = vmatprep.subr.mxu0 0.0
  %51 = vmatpush1.xpose.msra.mxu0 %v32
  %52 = vmatprep.subr.mxu0 0.0
  %53 = vmatpush1.xpose.msra.mxu0 %v33
  %54 = vmatprep.subr.mxu0 0.0
  %55 = vmatpush1.xpose.msra.mxu0 %v34
  %56 = vmatprep.subr.mxu0 0.0
  %57 = vmatpush1.xpose.msra.mxu0 %v35
  %58 = vmatprep.subr.mxu0 0.0
  %59 = vmatpush1.xpose.msra.mxu0 %v36
  %60 = vmatprep.subr.mxu0 0.0
  %61 = vmatpush1.xpose.msra.mxu0 %v37
  %62 = vmatprep.subr.mxu0 0.0
  %63 = vmatpush1.xpose.msra.mxu0 %v38
  %64 = vmatprep.subr.mxu0 0.0
  %65 = vmatpush1.xpose.msra.mxu0 %v39
  %66 = vmatprep.subr.mxu0 0.0
  %67 = vmatpush1.xpose.msra.mxu0 %v40
  %68 = vmatprep.subr.mxu0 0.0
  %69 = vmatpush1.xpose.msra.mxu0 %v41
  %70 = vmatprep.subr.mxu0 0.0
  %71 = vmatpush1.xpose.msra.mxu0 %v42
  %72 = vmatprep.subr.mxu0 0.0
  %73 = vmatpush1.xpose.msra.mxu0 %v43
  %74 = vmatprep.subr.mxu0 0.0
  %75 = vmatpush1.xpose.msra.mxu0 %v44
  %76 = vmatprep.subr.mxu0 0.0
  %77 = vmatpush1.xpose.msra.mxu0 %v45
  %78 = vmatprep.subr.mxu0 0.0
  %79 = vmatpush1.xpose.msra.mxu0 0.0
  %80 = vmatprep.subr.mxu0 0.0
  %81 = vmatpush1.xpose.msra.mxu0 0.0
  %82 = vmatprep.subr.mxu0 0.0
  %83 = vmatpush1.xpose.msra.mxu0 0.0
  %84 = vmatprep.subr.mxu0 0.0
  %85 = vmatpush1.xpose.msra.mxu0 0.0
  %86 = vmatprep.subr.mxu0 0.0
  %87 = vmatpush1.xpose.msra.mxu0 0.0
  %88 = vmatprep.subr.mxu0 0.0
  %89 = vmatpush1.xpose.msra.mxu0 0.0
  %90 = vmatprep.subr.mxu0 0.0
  %91 = vmatpush1.xpose.msra.mxu0 0.0
  %92 = vmatprep.subr.mxu0 0.0
  %93 = vmatpush1.xpose.msra.mxu0 0.0
  %94 = vmatprep.subr.mxu0 0.0
  %95 = vmatpush1.xpose.msra.mxu0 0.0
  %96 = vmatprep.subr.mxu0 0.0
  %97 = vmatpush1.xpose.msra.mxu0 0.0
  %98 = vmatprep.subr.mxu0 0.0
  %99 = vmatpush1.xpose.msra.mxu0 0.0
  %100 = vmatprep.subr.mxu0 0.0
  %101 = vmatpush1.xpose.msra.mxu0 0.0
  %102 = vmatprep.subr.mxu0 0.0
  %103 = vmatpush1.xpose.msra.mxu0 0.0
  %104 = vmatprep.subr.mxu0 0.0
  %105 = vmatpush1.xpose.msra.mxu0 0.0
  %106 = vmatprep.subr.mxu0 0.0
  %107 = vmatpush1.xpose.msra.mxu0 0.0
  %108 = vmatprep.subr.mxu0 0.0
  %109 = vmatpush1.xpose.msra.mxu0 0.0
  %110 = vmatprep.mubr.f32.mxu0 0.0
  %111 = vmatmul.mubr.f32.gmra.mrb[0].mxu0 %v26
  %v112 = vpop.f32.mrb[0].mxu0
  %v113 = vadd.f32 0.0, %v112
  %v114 = vpop.f32.mrb[0].mxu0
  %115 = vmatprep.mubr.f32.mxu0 0.0
  %116 = vmatmul.mubr.f32.gmra.mrb[0].mxu0 %v27
  %v117 = vpop.f32.mrb[0].mxu0
  %v118 = vadd.f32 0.0, %v117
  %v119 = vpop.f32.mrb[0].mxu0
  %120 = vdwg.mxu0
  %v121 = vadd.f32 %v28, %v113
  %v122 = vadd.f32 %v29, %v118
  %123 = vst [vmem:[#allocation2] sm:$0xff] %v121
  %124 = vst [vmem:[#allocation2 + $0x8] sm:$0xff] %v122
  %p125 = scmp.eq.s32.totalorder 0, 0
  // Predicated region
  $region26: #{lora_linear.1} parent=0 // pred_check
    %p126 = pneg %p125
  $region27: #{lora_linear.1} parent=0 // pred_check_branch
    %128 = sbr.rel (%p126) target = $region29
  $region28: #{lora_linear.1} parent=0 // pred_region
    // Predicated region
    $region30: #{lora_linear.1} parent=28 // pred_check
      %p129 = pneg %p20
    $region31: #{lora_linear.1} parent=28 // pred_check_branch
      %131 = sbr.rel (%p129) target = $region33
    $region32: #{lora_linear.1} parent=28 // pred_region
      %132 = vst [vmem:[#allocation3] sm:$0xff] 0.0
      %133 = vst [vmem:[#allocation3 + $0x8] sm:$0xff] 0.0
    $region33: #{lora_linear.1} parent=28 // pred_fallthru
      _
    %v134 = vld [vmem:[#allocation3] sm:$0xff]
    %v135 = vld [vmem:[#allocation3 + $0x8] sm:$0xff]
    %v136 = vld [vmem:[%s3] sm:$0xff]
    %v137 = vld [vmem:[%s3 + $0x8] sm:$0xff]
    %v138 = vld [vmem:[%s3 + $0x10] sm:$0xff]
    %v139 = vld [vmem:[%s3 + $0x18] sm:$0xff]
    %v140 = vld [vmem:[%s3 + $0x20] sm:$0xff]
    %v141 = vld [vmem:[%s3 + $0x28] sm:$0xff]
    %v142 = vld [vmem:[%s3 + $0x30] sm:$0xff]
    %v143 = vld [vmem:[%s3 + $0x38] sm:$0xff]
    %v144 = vld [vmem:[%s3 + $0x40] sm:$0xff]
    %v145 = vld [vmem:[%s3 + $0x48] sm:$0xff]
    %v146 = vld [vmem:[%s3 + $0x50] sm:$0xff]
    %v147 = vld [vmem:[%s3 + $0x58] sm:$0xff]
    %v148 = vld [vmem:[%s3 + $0x60] sm:$0xff]
    %v149 = vld [vmem:[%s3 + $0x68] sm:$0xff]
    %v150 = vld [vmem:[%s3 + $0x70] sm:$0xff]
    %v151 = vld [vmem:[%s3 + $0x78] sm:$0xff]
    %152 = vmatprep.subr.mxu0 0.0
    %153 = vmatpush1.xpose.msra.mxu0 %v136
    %154 = vmatprep.subr.mxu0 0.0
    %155 = vmatpush1.xpose.msra.mxu0 %v137
    %156 = vmatprep.subr.mxu0 0.0
    %157 = vmatpush1.xpose.msra.mxu0 %v138
    %158 = vmatprep.subr.mxu0 0.0
    %159 = vmatpush1.xpose.msra.mxu0 %v139
    %160 = vmatprep.subr.mxu0 0.0
    %161 = vmatpush1.xpose.msra.mxu0 %v140
    %162 = vmatprep.subr.mxu0 0.0
    %163 = vmatpush1.xpose.msra.mxu0 %v141
    %164 = vmatprep.subr.mxu0 0.0
    %165 = vmatpush1.xpose.msra.mxu0 %v142
    %166 = vmatprep.subr.mxu0 0.0
    %167 = vmatpush1.xpose.msra.mxu0 %v143
    %168 = vmatprep.subr.mxu0 0.0
    %169 = vmatpush1.xpose.msra.mxu0 %v144
    %170 = vmatprep.subr.mxu0 0.0
    %171 = vmatpush1.xpose.msra.mxu0 %v145
    %172 = vmatprep.subr.mxu0 0.0
    %173 = vmatpush1.xpose.msra.mxu0 %v146
    %174 = vmatprep.subr.mxu0 0.0
    %175 = vmatpush1.xpose.msra.mxu0 %v147
    %176 = vmatprep.subr.mxu0 0.0
    %177 = vmatpush1.xpose.msra.mxu0 %v148
    %178 = vmatprep.subr.mxu0 0.0
    %179 = vmatpush1.xpose.msra.mxu0 %v149
    %180 = vmatprep.subr.mxu0 0.0
    %181 = vmatpush1.xpose.msra.mxu0 %v150
    %182 = vmatprep.subr.mxu0 0.0
    %183 = vmatpush1.xpose.msra.mxu0 %v151
    %184 = vmatprep.subr.mxu0 0.0
    %185 = vmatpush1.xpose.msra.mxu0 0.0
    %186 = vmatprep.subr.mxu0 0.0
    %187 = vmatpush1.xpose.msra.mxu0 0.0
    %188 = vmatprep.subr.mxu0 0.0
    %189 = vmatpush1.xpose.msra.mxu0 0.0
    %190 = vmatprep.subr.mxu0 0.0
    %191 = vmatpush1.xpose.msra.mxu0 0.0
    %192 = vmatprep.subr.mxu0 0.0
    %193 = vmatpush1.xpose.msra.mxu0 0.0
    %194 = vmatprep.subr.mxu0 0.0
    %195 = vmatpush1.xpose.msra.mxu0 0.0
    %196 = vmatprep.subr.mxu0 0.0
    %197 = vmatpush1.xpose.msra.mxu0 0.0
    %198 = vmatprep.subr.mxu0 0.0
    %199 = vmatpush1.xpose.msra.mxu0 0.0
    %200 = vmatprep.subr.mxu0 0.0
    %201 = vmatpush1.xpose.msra.mxu0 0.0
    %202 = vmatprep.subr.mxu0 0.0
    %203 = vmatpush1.xpose.msra.mxu0 0.0
    %204 = vmatprep.subr.mxu0 0.0
    %205 = vmatpush1.xpose.msra.mxu0 0.0
    %206 = vmatprep.subr.mxu0 0.0
    %207 = vmatpush1.xpose.msra.mxu0 0.0
    %208 = vmatprep.subr.mxu0 0.0
    %209 = vmatpush1.xpose.msra.mxu0 0.0
    %210 = vmatprep.subr.mxu0 0.0
    %211 = vmatpush1.xpose.msra.mxu0 0.0
    %212 = vmatprep.subr.mxu0 0.0
    %213 = vmatpush1.xpose.msra.mxu0 0.0
    %214 = vmatprep.subr.mxu0 0.0
    %215 = vmatpush1.xpose.msra.mxu0 0.0
    %216 = vmatprep.mubr.f32.mxu0 0.0
    %217 = vmatmul.mubr.f32.gmra.mrb[0].mxu0 %v26
    %v218 = vpop.f32.mrb[0].mxu0
    %v219 = vadd.f32 0.0, %v218
    %v220 = vpop.f32.mrb[0].mxu0
    %221 = vmatprep.mubr.f32.mxu0 0.0
    %222 = vmatmul.mubr.f32.gmra.mrb[0].mxu0 %v27
    %v223 = vpop.f32.mrb[0].mxu0
    %v224 = vadd.f32 0.0, %v223
    %v225 = vpop.f32.mrb[0].mxu0
    %226 = vdwg.mxu0
    %v227 = vadd.f32 %v134, %v219
    %v228 = vadd.f32 %v135, %v224
    %229 = vst [vmem:[#allocation3] sm:$0xff] %v227
    %230 = vst [vmem:[#allocation3 + $0x8] sm:$0xff] %v228
  $region29: #{lora_linear.1} parent=0 // pred_fallthru
    _
  // Predicated region
  $region34: #{lora_linear.1} parent=0 // pred_check
    %p231 = pneg %p20
  $region35: #{lora_linear.1} parent=0 // pred_check_branch
    %233 = sbr.rel (%p231) target = $region37
  $region36: #{lora_linear.1} parent=0 // pred_region
    %v234 = vld [vmem:[#allocation3] sm:$0xff]
    %v235 = vld [vmem:[#allocation3 + $0x8] sm:$0xff]
    %v236 = vld [vmem:[%s4] sm:$0xff]
    %v237 = vld [vmem:[%s4 + $0x8] sm:$0xff]
    %v238 = vld [vmem:[%s4 + $0x10] sm:$0xff]
    %v239 = vld [vmem:[%s4 + $0x18] sm:$0xff]
    %v240 = vld [vmem:[%s4 + $0x20] sm:$0xff]
    %v241 = vld [vmem:[%s4 + $0x28] sm:$0xff]
    %v242 = vld [vmem:[%s4 + $0x30] sm:$0xff]
    %v243 = vld [vmem:[%s4 + $0x38] sm:$0xff]
    %v244 = vld [vmem:[%s4 + $0x40] sm:$0xff]
    %v245 = vld [vmem:[%s4 + $0x48] sm:$0xff]
    %v246 = vld [vmem:[%s4 + $0x50] sm:$0xff]
    %v247 = vld [vmem:[%s4 + $0x58] sm:$0xff]
    %v248 = vld [vmem:[%s4 + $0x60] sm:$0xff]
    %v249 = vld [vmem:[%s4 + $0x68] sm:$0xff]
    %v250 = vld [vmem:[%s4 + $0x70] sm:$0xff]
    %v251 = vld [vmem:[%s4 + $0x78] sm:$0xff]
    %252 = vmatprep.subr.mxu0 0.0
    %253 = vmatpush1.xpose.msra.mxu0 %v236
    %254 = vmatprep.subr.mxu0 0.0
    %255 = vmatpush1.xpose.msra.mxu0 %v237
    %256 = vmatprep.subr.mxu0 0.0
    %257 = vmatpush1.xpose.msra.mxu0 %v238
    %258 = vmatprep.subr.mxu0 0.0
    %259 = vmatpush1.xpose.msra.mxu0 %v239
    %260 = vmatprep.subr.mxu0 0.0
    %261 = vmatpush1.xpose.msra.mxu0 %v240
    %262 = vmatprep.subr.mxu0 0.0
    %263 = vmatpush1.xpose.msra.mxu0 %v241
    %264 = vmatprep.subr.mxu0 0.0
    %265 = vmatpush1.xpose.msra.mxu0 %v242
    %266 = vmatprep.subr.mxu0 0.0
    %267 = vmatpush1.xpose.msra.mxu0 %v243
    %268 = vmatprep.subr.mxu0 0.0
    %269 = vmatpush1.xpose.msra.mxu0 %v244
    %270 = vmatprep.subr.mxu0 0.0
    %271 = vmatpush1.xpose.msra.mxu0 %v245
    %272 = vmatprep.subr.mxu0 0.0
    %273 = vmatpush1.xpose.msra.mxu0 %v246
    %274 = vmatprep.subr.mxu0 0.0
    %275 = vmatpush1.xpose.msra.mxu0 %v247
    %276 = vmatprep.subr.mxu0 0.0
    %277 = vmatpush1.xpose.msra.mxu0 %v248
    %278 = vmatprep.subr.mxu0 0.0
    %279 = vmatpush1.xpose.msra.mxu0 %v249
    %280 = vmatprep.subr.mxu0 0.0
    %281 = vmatpush1.xpose.msra.mxu0 %v250
    %282 = vmatprep.subr.mxu0 0.0
    %283 = vmatpush1.xpose.msra.mxu0 %v251
    %284 = vmatprep.subr.mxu0 0.0
    %285 = vmatpush1.xpose.msra.mxu0 0.0
    %286 = vmatprep.subr.mxu0 0.0
    %287 = vmatpush1.xpose.msra.mxu0 0.0
    %288 = vmatprep.subr.mxu0 0.0
    %289 = vmatpush1.xpose.msra.mxu0 0.0
    %290 = vmatprep.subr.mxu0 0.0
    %291 = vmatpush1.xpose.msra.mxu0 0.0
    %292 = vmatprep.subr.mxu0 0.0
    %293 = vmatpush1.xpose.msra.mxu0 0.0
    %294 = vmatprep.subr.mxu0 0.0
    %295 = vmatpush1.xpose.msra.mxu0 0.0
    %296 = vmatprep.subr.mxu0 0.0
    %297 = vmatpush1.xpose.msra.mxu0 0.0
    %298 = vmatprep.subr.mxu0 0.0
    %299 = vmatpush1.xpose.msra.mxu0 0.0
    %300 = vmatprep.subr.mxu0 0.0
    %301 = vmatpush1.xpose.msra.mxu0 0.0
    %302 = vmatprep.subr.mxu0 0.0
    %303 = vmatpush1.xpose.msra.mxu0 0.0
    %304 = vmatprep.subr.mxu0 0.0
    %305 = vmatpush1.xpose.msra.mxu0 0.0
    %306 = vmatprep.subr.mxu0 0.0
    %307 = vmatpush1.xpose.msra.mxu0 0.0
    %308 = vmatprep.subr.mxu0 0.0
    %309 = vmatpush1.xpose.msra.mxu0 0.0
    %310 = vmatprep.subr.mxu0 0.0
    %311 = vmatpush1.xpose.msra.mxu0 0.0
    %312 = vmatprep.subr.mxu0 0.0
    %313 = vmatpush1.xpose.msra.mxu0 0.0
    %314 = vmatprep.subr.mxu0 0.0
    %315 = vmatpush1.xpose.msra.mxu0 0.0
    %316 = vmatprep.mubr.f32.mxu0 0.0
    %317 = vmatmul.mubr.f32.gmra.mrb[0].mxu0 %v234
    %v318 = vpop.f32.mrb[0].mxu0
    %v319 = vadd.f32 0.0, %v318
    %v320 = vpop.f32.mrb[0].mxu0
    %321 = vmatprep.mubr.f32.mxu0 0.0
    %322 = vmatmul.mubr.f32.gmra.mrb[0].mxu0 %v235
    %v323 = vpop.f32.mrb[0].mxu0
    %v324 = vadd.f32 0.0, %v323
    %v325 = vpop.f32.mrb[0].mxu0
    %326 = vdwg.mxu0
    %v327 = vld [vmem:[#allocation2] sm:$0xff]
    %v328 = vld [vmem:[#allocation2 + $0x8] sm:$0xff]
    %v329 = vld [vmem:[%s2] sm:$0x1]
    %v331 = vlaneseq
    %v332 = vshrl.u32 %v331, 7
    %v333 = vsub.s32 0, %v332
    %v334 = vrot.slane %v329, %v333
    %v336 = vadd.f32 %v327, %v334
    %v337 = vadd.f32 %v328, %v334
    %v338 = vadd.f32 %v336, %v319
    %v339 = vadd.f32 %v337, %v324
    %340 = vst [vmem:[%s5] sm:$0xff] %v338
    %341 = vst [vmem:[%s5 + $0x8] sm:$0xff] %v339
  $region37: #{lora_linear.1} parent=0 // pred_fallthru
    _
  // Predicated region
  $region38: #{lora_linear.1} parent=0 // pred_check
    _
  $region39: #{lora_linear.1} parent=0 // pred_check_branch
    %343 = sbr.rel (0) target = $region41
  $region40: #{lora_linear.1} parent=0 // pred_region
    _
  $region41: #{lora_linear.1} parent=0 // pred_fallthru
    _
  // Predicated region
  $region42: #{lora_linear.1} parent=0 // pred_check
    _
  $region43: #{lora_linear.1} parent=0 // pred_check_branch
    %345 = sbr.rel (0) target = $region45
  $region44: #{lora_linear.1} parent=0 // pred_region
    _
  $region45: #{lora_linear.1} parent=0 // pred_fallthru
    _

</llo_original>
